<compile_context>
chip_gen: v5e
topology: v5e:2x2
jax: 0.10.0
libtpu: 0.0.40
codegen_flags: <defaults>
</compile_context>

<pallas_src>
import math

import jax
import jax.numpy as jnp
from jax.experimental import pallas as pl
from jax.experimental.pallas import tpu as pltpu


def _layer_scale_kernel(x_ref, gamma_ref, o_ref):
    # x_ref:     (TILE_R, dim_p)  VMEM, native input dtype
    # gamma_ref: (1, dim_p)       VMEM, compute dtype (broadcast over rows)
    # o_ref:     (TILE_R, dim_p)  VMEM, output dtype
    # dtype promotion happens here on the VPU, not as a separate XLA HBM pass.
    o_ref[...] = (x_ref[...] * gamma_ref[...]).astype(o_ref.dtype)


def _sublane(itemsize: int) -> int:
    return max(8, 32 // itemsize)  # 8 for f32, 16 for bf16, 32 for 8-bit


def layer_scale(x: jax.Array, gamma: jax.Array, *, out_dtype=None) -> jax.Array:
    """y = x * gamma, gamma broadcast along the last axis of x.

    out_dtype=None gives strict PyTorch promotion (result_type(x, gamma));
    pass e.g. jnp.bfloat16 to keep a bf16 residual stream (halves the write
    bandwidth of this HBM-bound kernel).
    """
    orig_shape = x.shape
    dim = orig_shape[-1]
    assert gamma.shape == (dim,), f"gamma must be ({dim},), got {gamma.shape}"

    compute_dtype = jnp.result_type(x.dtype, gamma.dtype)
    out_dtype = compute_dtype if out_dtype is None else jnp.dtype(out_dtype)

    x2d = x.reshape(-1, dim)                     # metadata-only for contiguous x
    rows = x2d.shape[0]
    if rows == 0:                                # degenerate empty input
        return jnp.zeros(orig_shape, out_dtype)

    x_item = jnp.dtype(x.dtype).itemsize
    out_item = jnp.dtype(out_dtype).itemsize
    g_item = jnp.dtype(compute_dtype).itemsize

    # --- Lane-dense packing: fold k rows into one lcm(dim, 128)-lane row so
    # stores are full unmasked vregs and DMA rows stay dense.
    if dim < 128:
        lanes = (dim * 128) // math.gcd(dim, 128)   # lcm(dim, 128)
        k = lanes // dim
        if rows % k != 0:
            k = 1  # ragged tail: fall back (full-dim block is always legal)
    else:
        k = 1
    dim_p = k * dim
    rows_p = rows // k

    gamma_row = jnp.tile(gamma.astype(compute_dtype), k).reshape(1, dim_p)
    x_packed = x2d.reshape(rows_p, dim_p)            # metadata-only reshape

    # --- Tile sizing from a per-generation VMEM budget.
    sublane_align = max(_sublane(x_item), _sublane(out_item))
    per_row_vmem = 2 * dim_p * (x_item + out_item)   # double-buffered in + out
    try:
        vmem_cap = int(pltpu.get_tpu_info().vmem_capacity_bytes)
    except Exception:
        vmem_cap = 64 * 1024 * 1024                  # conservative (v7x-sized)
    vmem_budget = min(int(vmem_cap * 0.4), 48 * 1024 * 1024)

    tile_r = max(sublane_align,
                 (vmem_budget // per_row_vmem) // sublane_align * sublane_align)

    # Keep >=2 grid steps when there is enough work so v7x's 2 TensorCores can
    # split the parallel row axis (a single harmless extra step on v5e/v6e).
    if rows_p >= 2 * sublane_align:
        half = pl.cdiv(pl.cdiv(rows_p, 2), sublane_align) * sublane_align
        tile_r = min(tile_r, half)
    if tile_r >= rows_p:
        tile_r = rows_p       # block == full row extent: always a legal block

    grid = (pl.cdiv(rows_p, tile_r),)

    footprint = 2 * tile_r * dim_p * (x_item + out_item) + 2 * dim_p * g_item
    vmem_limit = int(min(vmem_cap - (8 << 20),
                         max(32 << 20, footprint + (8 << 20))))

    cost = pl.CostEstimate(
        flops=rows * dim,
        transcendentals=0,
        bytes_accessed=rows * dim * (x_item + out_item) + dim_p * g_item,
    )

    out = pl.pallas_call(
        _layer_scale_kernel,
        out_shape=jax.ShapeDtypeStruct((rows_p, dim_p), out_dtype),
        grid=grid,
        in_specs=[
            pl.BlockSpec((tile_r, dim_p), lambda i: (i, 0)),
            pl.BlockSpec((1, dim_p), lambda i: (0, 0)),
        ],
        out_specs=pl.BlockSpec((tile_r, dim_p), lambda i: (i, 0)),
        compiler_params=pltpu.CompilerParams(
            dimension_semantics=("parallel",),
            vmem_limit_bytes=vmem_limit,
        ),
        cost_estimate=cost,
    )(x_packed, gamma_row)

    return out.reshape(rows, dim).reshape(orig_shape)


if __name__ == "__main__":
    key = jax.random.PRNGKey(0)

    # Module config: dim = hidden = 32, init_values = 1e-5
    dim = 32
    init_values = 1e-5
    gamma = init_values * jnp.ones((dim,), dtype=jnp.float32)

    k1, k2, k3, k4 = jax.random.split(key, 4)

    # (batch, seq, dim) residual-stream input — small-dim lane-packed path.
    x = jax.random.normal(k1, (2, 8, dim), dtype=jnp.float32)
    y = jax.block_until_ready(layer_scale(x, gamma))
    assert y.shape == x.shape
    assert jnp.allclose(y, x * gamma, atol=1e-6, rtol=1e-6)

    # Ragged row count (rows % k != 0 -> unpacked fallback, full-dim block).
    x2 = jax.random.normal(k2, (3, 5, dim), dtype=jnp.float32)
    y2 = jax.block_until_ready(layer_scale(x2, gamma))
    assert y2.shape == x2.shape
    assert jnp.allclose(y2, x2 * gamma, atol=1e-6, rtol=1e-6)

    # Wide-dim path (dim >= 128), bf16 x * f32 gamma promotes in-kernel to f32.
    dim3 = 256
    gamma3 = init_values * jnp.ones((dim3,), dtype=jnp.float32)
    x3 = jax.random.normal(k3, (2, 8, dim3), dtype=jnp.bfloat16)
    y3 = jax.block_until_ready(layer_scale(x3, gamma3))
    assert y3.dtype == jnp.float32
    assert jnp.allclose(y3, x3.astype(jnp.float32) * gamma3, atol=1e-6, rtol=1e-6)

    # Optional bf16 output (halved write stream) on the same inputs.
    y3b = jax.block_until_ready(layer_scale(x3, gamma3, out_dtype=jnp.bfloat16))
    assert y3b.dtype == jnp.bfloat16
    assert jnp.allclose(y3b.astype(jnp.float32),
                        x3.astype(jnp.float32) * gamma3, atol=1e-3, rtol=1e-2)

    # Multi-step grid with a partial last block (rows not multiple of tile_r).
    dim4 = 128
    gamma4 = init_values * jnp.ones((dim4,), dtype=jnp.float32)
    x4 = jax.random.normal(k4, (4, 125, dim4), dtype=jnp.float32)
    y4 = jax.block_until_ready(layer_scale(x4, gamma4))
    assert y4.shape == x4.shape
    assert jnp.allclose(y4, x4 * gamma4, atol=1e-6, rtol=1e-6)

    print("KERNEL_OK")
</pallas_src>

<mosaic_0001>
module attributes {stable_mosaic.version = 11 : i64} {
  func.func @_layer_scale_kernel(%arg0: i32, %arg1: memref<4x128xf32, #tpu.memory_space<vmem>>, %arg2: memref<1x128xf32, #tpu.memory_space<vmem>>, %arg3: memref<4x128xf32, #tpu.memory_space<vmem>>) attributes {dimension_semantics = [#tpu.dimension_semantics<parallel>], iteration_bounds = array<i64: 1>, scalar_prefetch = 0 : i64, scratch_operands = 0 : i64, tpu.core_type = #tpu.core_type<tc>, window_params = [{transform_indices = @transform_0, window_bounds = array<i64: 4, 128>}, {pipeline_mode = #tpu.pipeline_mode<synchronous>, transform_indices = @transform_1, window_bounds = array<i64: 1, 128>}, {transform_indices = @transform_2, window_bounds = array<i64: 4, 128>}]} {
    %c0 = arith.constant 0 : index
    %c0_0 = arith.constant 0 : index
    %0 = vector.load %arg1[%c0, %c0_0] : memref<4x128xf32, #tpu.memory_space<vmem>>, vector<4x128xf32>
    %c0_1 = arith.constant 0 : index
    %c0_2 = arith.constant 0 : index
    %1 = vector.load %arg2[%c0_1, %c0_2] : memref<1x128xf32, #tpu.memory_space<vmem>>, vector<1x128xf32>
    %2 = vector.broadcast %1 : vector<1x128xf32> to vector<4x128xf32>
    %3 = arith.mulf %0, %2 : vector<4x128xf32>
    %c0_3 = arith.constant 0 : index
    %c0_4 = arith.constant 0 : index
    %4 = vector.load %arg3[%c0_3, %c0_4] : memref<4x128xf32, #tpu.memory_space<vmem>>, vector<4x128xf32>
    tpu.vector_store %arg3[%c0_3, %c0_4], %3 {strides = array<i32>} : memref<4x128xf32, #tpu.memory_space<vmem>>, vector<4x128xf32>,
    return
  }
  func.func @transform_0(%arg0: i32) -> (i32, i32) {
    %c0_i32 = arith.constant 0 : i32
    %c0_i32_0 = arith.constant 0 : i32
    return %arg0, %c0_i32 : i32, i32
  }
  func.func @transform_1(%arg0: i32) -> (i32, i32) {
    %c0_i32 = arith.constant 0 : i32
    %c0_i32_0 = arith.constant 0 : i32
    %c0_i32_1 = arith.constant 0 : i32
    return %c0_i32, %c0_i32_0 : i32, i32
  }
  func.func @transform_2(%arg0: i32) -> (i32, i32) {
    %c0_i32 = arith.constant 0 : i32
    %c0_i32_0 = arith.constant 0 : i32
    return %arg0, %c0_i32 : i32, i32
  }
}

</mosaic_0001>

<llo_original>
// kernel: tpu_custom_call.1
$region0: #{tpu_custom_call.1}
  #allocation0 [shape = 'u32[]', space=smem, size = 0x4, offset = 0x4, fixed_abs, tag = 'smem constant byte address 0x4 - core index']
  #allocation1 [shape = 'u32[72,128]{1,0:T(1,128)}', space=vmem, size = 0x9000, scoped, tag = 'internal scratch']
  %s0 = inlined_call_operand.hbm [shape: f32[4,128], index: 0, kind: input, shape index: {}]
  %s1 = inlined_call_operand.hbm [shape: f32[1,128], index: 1, kind: input, shape index: {}]
  %s2 = inlined_call_operand.hbm [shape: f32[4,128], index: 2, kind: output, shape index: {}]
  %s3 = sld [smem:[#allocation0]]
  $region26: #{tpu_custom_call.1} parent=0
    _
  %s5 = ssub.s32 1, %s3
  %s6 = scalar_select 0, %s5, %s3
  $region1: #{tpu_custom_call.1} parent=0
    #allocation2 [shape = 'u8[2048]{0}', space=vmem, size = 0x800, scoped, tag = 'input window, operand 0, single buffered']
    #allocation3 [shape = 's32[1]{0}', space=sflag, size = 0x4, scoped, tag = 'scoped memory for tpu_custom_call.1']
    #allocation4 [shape = 's32[1]{0}', space=sflag, size = 0x4, scoped, tag = 'scoped memory for tpu_custom_call.1']
    #allocation5 [shape = 'u8[512]{0}', space=vmem, size = 0x400, scoped, tag = 'input window, operand 1, single buffered']
    #allocation6 [shape = 's32[1]{0}', space=sflag, size = 0x4, scoped, tag = 'scoped memory for tpu_custom_call.1']
    #allocation7 [shape = 'u8[2048]{0}', space=vmem, size = 0x800, scoped, tag = 'output window, operand 0, single buffered']
    %7 = vsyncpa [#allocation3], 0
    %8 = vsyncpa [#allocation6], 0
    %9 = vsyncpa [#allocation4], 0
    // Predicated region
    $region2: #{tpu_custom_call.1} parent=1 // pred_check
      _
    $region3: #{tpu_custom_call.1} parent=1 // pred_check_branch
      %11 = sbr.rel (0) target = $region5
    $region4: #{tpu_custom_call.1} parent=1 // pred_region
      %13 = vsyncadd [#allocation3], 0
      %s15 = sshll.u32 %s0, 4
      %s16 = int_to_ptr.hbm [resolvable:$true] %s15
      %s17 = sshll.u32 [#allocation2], 4
      %s18 = int_to_ptr.vmem [resolvable:$true] %s17
      %20 = dma.hbm_to_vmem [thread:$0]  %s16, 64, %s18, [#allocation3]
    $region5: #{tpu_custom_call.1} parent=1 // pred_fallthru
      _
    // Predicated region
    $region6: #{tpu_custom_call.1} parent=1 // pred_check
      _
    $region7: #{tpu_custom_call.1} parent=1 // pred_check_branch
      %22 = sbr.rel (0) target = $region9
    $region8: #{tpu_custom_call.1} parent=1 // pred_region
      %24 = vsyncadd [#allocation6], 0
      %s26 = sshll.u32 %s1, 4
      %s27 = int_to_ptr.hbm [resolvable:$true] %s26
      %s28 = sshll.u32 [#allocation5], 4
      %s29 = int_to_ptr.vmem [resolvable:$true] %s28
      %31 = dma.hbm_to_vmem [thread:$0]  %s27, 16, %s29, [#allocation6]
    $region9: #{tpu_custom_call.1} parent=1 // pred_fallthru
      _
    // Predicated region
    $region10: #{tpu_custom_call.1} parent=1 // pred_check
      _
    $region11: #{tpu_custom_call.1} parent=1 // pred_check_branch
      %33 = sbr.rel (0) target = $region13
    $region12: #{tpu_custom_call.1} parent=1 // pred_region
      %35 = dma.done [#allocation3], 64
    $region13: #{tpu_custom_call.1} parent=1 // pred_fallthru
      _
    // Predicated region
    $region14: #{tpu_custom_call.1} parent=1 // pred_check
      _
    $region15: #{tpu_custom_call.1} parent=1 // pred_check_branch
      %37 = sbr.rel (0) target = $region17
    $region16: #{tpu_custom_call.1} parent=1 // pred_region
      %39 = dma.done [#allocation6], 16
    $region17: #{tpu_custom_call.1} parent=1 // pred_fallthru
      _
    %v40 = vld [vmem:[#allocation2] sm:$0xf]
    %v41 = vld [vmem:[#allocation5] sm:$0x1]
    %v43 = vperm.slane %v41, 0
    %v45 = vmul.f32 %v40, %v43
    %46 = vst [vmem:[#allocation7] sm:$0xf] %v45
    // Predicated region
    $region18: #{tpu_custom_call.1} parent=1 // pred_check
      _
    $region19: #{tpu_custom_call.1} parent=1 // pred_check_branch
      %48 = sbr.rel (0) target = $region21
    $region20: #{tpu_custom_call.1} parent=1 // pred_region
      %50 = vsyncadd [#allocation4], 0
      %s52 = sshll.u32 [#allocation7], 4
      %s53 = int_to_ptr.vmem [resolvable:$true] %s52
      %s54 = sshll.u32 %s2, 4
      %s55 = int_to_ptr.hbm [resolvable:$true] %s54
      %57 = dma.vmem_to_hbm [thread:$0]  %s53, 64, %s55, [#allocation4]
    $region21: #{tpu_custom_call.1} parent=1 // pred_fallthru
      _
    // Predicated region
    $region22: #{tpu_custom_call.1} parent=1 // pred_check
      _
    $region23: #{tpu_custom_call.1} parent=1 // pred_check_branch
      %59 = sbr.rel (0) target = $region25
    $region24: #{tpu_custom_call.1} parent=1 // pred_region
      %61 = dma.done [#allocation4], 64
    $region25: #{tpu_custom_call.1} parent=1 // pred_fallthru
      _
    %62 = vsyncpa [#allocation3], 1
    %63 = vsyncpa [#allocation6], 1
    %64 = vsyncpa [#allocation4], 1

</llo_original>
